<compile_context>
chip_gen: v5e
topology: v5e:2x2
jax: 0.10.0
libtpu: 0.0.40
codegen_flags: <defaults>
</compile_context>

<pallas_src>
import functools

import jax
import jax.numpy as jnp
from jax.experimental import pallas as pl
from jax.experimental.pallas import tpu as pltpu

LANE = 128  # TPU lane width; every padded feature dim is 128.


# ----------------------------- Pallas kernel ------------------------------- #
def _vae_kernel(x_ref, eps_ref, w_ref, b_ref, out_ref, *, d, latent, act_dtype):
    """x_ref  : (TB, d)      f32 input features
       eps_ref: (TB, latent) f32 reparam noise
       w_ref  : (6, 128, 128) bf16 zero-padded weight stack (VMEM-resident)
       b_ref  : (6, 1, 128)   f32  zero-padded bias stack   (VMEM-resident)
       out_ref: (TB, 128)     f32 packed [recon | z | mu | logvar | 0]
    """
    tb = x_ref.shape[0]
    x = x_ref[...]                            # (TB, d)   f32
    eps = eps_ref[...]                        # (TB, L)   f32

    def dense(a, layer):
        # bf16 operands feed the MXU at full rate; accumulate in f32.
        w = w_ref[layer]                      # (128, 128) bf16 (static index)
        b = b_ref[layer]                      # (1, 128)   f32
        acc = jnp.dot(a.astype(jnp.bfloat16), w,
                      preferred_element_type=jnp.float32)
        return acc + b

    # --- encoder input slab assembled in-kernel: [x | 0] (zero pad lanes) ---
    xin = jnp.concatenate(
        [x.astype(act_dtype), jnp.zeros((tb, LANE - d), act_dtype)], axis=-1)

    # --- encoder MLP (ReLU hidden layers) ---
    h = jnp.maximum(dense(xin, 0), 0.0).astype(act_dtype)
    h = jnp.maximum(dense(h, 1), 0.0).astype(act_dtype)

    # --- fused latent heads: one matmul produces [mu | logvar | 0] ---
    head = dense(h, 2)                        # (TB, 128) f32
    mu = head[:, 0:latent]
    lv = head[:, latent:2 * latent]

    # --- reparametrize: z = mu + exp(0.5 * logvar) * eps (all f32) ---
    z = mu + jnp.exp(0.5 * lv) * eps          # (TB, L) f32

    # --- decoder MLP (ReLU hidden layers, sigmoid output) ---
    zp = jnp.concatenate(
        [z.astype(act_dtype), jnp.zeros((tb, LANE - latent), act_dtype)],
        axis=-1)
    dh = jnp.maximum(dense(zp, 3), 0.0).astype(act_dtype)
    dh = jnp.maximum(dense(dh, 4), 0.0).astype(act_dtype)
    logits = dense(dh, 5)[:, 0:d]
    recon = jax.nn.sigmoid(logits)            # f32, numerically safe sigmoid

    # --- single lane-dense packed write: [recon | z | mu | logvar | 0] ---
    pad_w = LANE - (d + 3 * latent)
    out_ref[...] = jnp.concatenate(
        [recon, z, mu, lv, jnp.zeros((tb, pad_w), jnp.float32)], axis=-1)


# ------------------------------ host wrapper -------------------------------- #
def _round_up(a, m):
    return (a + m - 1) // m * m


def _use_bf16_acts():
    """bf16 activation chain only on chips with a bf16 VPU (v5p/v6e/v7x)."""
    try:
        kind = jax.devices()[0].device_kind.lower()
    except Exception:
        return True
    for old in ("v2", "v3", "v4", "v5 lite", "v5e", "v5lite"):
        if old in kind:
            return False
    return True


@functools.partial(jax.jit, static_argnames=("bf16_acts",))
def vae_forward(x, eps, w_stack, b_stack, bf16_acts=True):
    """Fused VAE forward. Returns (out, z, mu, logvar)."""
    B, D = x.shape
    L = eps.shape[1]
    assert D + 3 * L <= LANE, "dims exceed single-lane output packing"

    x = x.astype(jnp.float32)
    eps = eps.astype(jnp.float32)

    # --- batch tiling: big tiles to amortize per-step overhead and the serial
    #     6-matmul MXU fill/drain; multiple of 16 (bf16 native sublane tile);
    #     for larger batches keep >= 2 grid steps so both v7x cores are used.
    MAX_TB = 1024
    if B <= 256:
        TB = _round_up(max(B, 16), 16)                 # single grid step
    else:
        TB = min(MAX_TB, _round_up(pl.cdiv(B, 2), 16))  # >= 2 grid steps
    B_pad = _round_up(B, TB)
    if B_pad != B:
        padn = B_pad - B
        x = jnp.concatenate([x, jnp.zeros((padn, D), jnp.float32)], axis=0)
        eps = jnp.concatenate([eps, jnp.zeros((padn, L), jnp.float32)], axis=0)
    grid = (B_pad // TB,)

    act_dtype = jnp.bfloat16 if bf16_acts else jnp.float32

    out_packed = pl.pallas_call(
        functools.partial(_vae_kernel, d=D, latent=L, act_dtype=act_dtype),
        out_shape=jax.ShapeDtypeStruct((B_pad, LANE), jnp.float32),
        grid_spec=pltpu.PrefetchScalarGridSpec(
            num_scalar_prefetch=0,
            grid=grid,
            in_specs=[
                # last dim == full array dim -> legal sub-128 block
                pl.BlockSpec((TB, D), lambda i: (i, 0)),            # x
                pl.BlockSpec((TB, L), lambda i: (i, 0)),            # eps
                # constant block index -> fetched once, VMEM-resident
                pl.BlockSpec(w_stack.shape, lambda i: (0, 0, 0)),   # weights
                pl.BlockSpec(b_stack.shape, lambda i: (0, 0, 0)),   # biases
            ],
            out_specs=pl.BlockSpec((TB, LANE), lambda i: (i, 0)),
        ),
        compiler_params=pltpu.CompilerParams(
            dimension_semantics=("parallel",),
        ),
    )(x, eps, w_stack, b_stack)

    out_packed = out_packed[:B]
    recon = out_packed[:, 0:D]
    z = out_packed[:, D:D + L]
    mu = out_packed[:, D + L:D + 2 * L]
    lv = out_packed[:, D + 2 * L:D + 3 * L]
    return recon, z, mu, lv


# --------------------------- parameter creation ----------------------------- #
def init_params(key, input_dim, hidden_sizes, latent_dim):
    """Synthetic params, zero-padded into stacked slabs.

    Layers: enc(D->h1), enc(h1->h2), fused head(h2->2L),
            dec(L->h2), dec(h2->h1), out(h1->D).
    Weights stored bf16 (MXU-native), biases f32 (zeros, as in the original).
    NOTE: padded weight rows/cols MUST stay zero (real checkpoints would need
    identical zero-padding) so padded lanes never leak into later layers.
    """
    h1, h2 = hidden_sizes
    dims = [
        (input_dim, h1),
        (h1, h2),
        (h2, 2 * latent_dim),   # fused mu | logvar head
        (latent_dim, h2),
        (h2, h1),
        (h1, input_dim),
    ]
    n = len(dims)
    w_stack = jnp.zeros((n, LANE, LANE), jnp.bfloat16)
    b_stack = jnp.zeros((n, 1, LANE), jnp.float32)
    for i, (din, dout) in enumerate(dims):
        key, kw = jax.random.split(key)
        w = 0.05 * jax.random.normal(kw, (din, dout), dtype=jnp.float32)
        w_stack = w_stack.at[i, :din, :dout].set(w.astype(jnp.bfloat16))
    return w_stack, b_stack


# ----------------------------- pure-JAX reference ---------------------------- #
def vae_reference(x, eps, w_stack, b_stack, D, L):
    w = w_stack.astype(jnp.float32)
    b = b_stack.astype(jnp.float32)

    xin = jnp.zeros((x.shape[0], LANE), jnp.float32).at[:, :D].set(x)

    def dense(a, i):
        return jnp.dot(a, w[i]) + b[i]

    h = jnp.maximum(dense(xin, 0), 0.0)
    h = jnp.maximum(dense(h, 1), 0.0)
    head = dense(h, 2)
    mu, lv = head[:, :L], head[:, L:2 * L]
    z = mu + jnp.exp(0.5 * lv) * eps
    zp = jnp.zeros((x.shape[0], LANE), jnp.float32).at[:, :L].set(z)
    d1 = jnp.maximum(dense(zp, 3), 0.0)
    d1 = jnp.maximum(dense(d1, 4), 0.0)
    out = jax.nn.sigmoid(dense(d1, 5)[:, :D])
    return out, z, mu, lv


# ---------------------------------- main ------------------------------------ #
if __name__ == "__main__":
    D = 32             # setup['input_dim']
    HIDDEN = (64, 32)  # setup['linear_layer_sizes']
    L = 16             # latent_dim

    key = jax.random.PRNGKey(0)
    kx, keps, kp = jax.random.split(key, 3)
    w_stack, b_stack = init_params(kp, D, HIDDEN, L)
    bf16_acts = _use_bf16_acts()

    def check(B, kx, keps):
        x = jax.random.normal(kx, (B, D), dtype=jnp.float32)
        eps = jax.random.normal(keps, (B, L), dtype=jnp.float32)
        out, z, mu, logvar = vae_forward(x, eps, w_stack, b_stack,
                                         bf16_acts=bf16_acts)
        jax.block_until_ready((out, z, mu, logvar))
        assert out.shape == (B, D) and z.shape == (B, L)
        assert mu.shape == (B, L) and logvar.shape == (B, L)
        ro, rz, rmu, rlv = vae_reference(x, eps, w_stack, b_stack, D, L)
        for a, b_ in ((out, ro), (z, rz), (mu, rmu), (logvar, rlv)):
            assert bool(jnp.all(jnp.isfinite(a)))
            assert bool(jnp.allclose(a, b_, atol=2e-2, rtol=2e-2))

    # Small batch (single grid step, TB rounded to 16).
    check(8, kx, keps)
    # Moderate batch exercising the multi-step / batch-padded path.
    kx2, keps2 = jax.random.split(jax.random.PRNGKey(1))
    check(272, kx2, keps2)

    print("KERNEL_OK")
</pallas_src>

<mosaic_0001>
module attributes {stable_mosaic.version = 11 : i64} {
  func.func @_vae_kernel(%arg0: i32, %arg1: memref<16x32xf32, #tpu.memory_space<vmem>>, %arg2: memref<16x16xf32, #tpu.memory_space<vmem>>, %arg3: memref<6x128x128xbf16, #tpu.memory_space<vmem>>, %arg4: memref<6x1x128xf32, #tpu.memory_space<vmem>>, %arg5: memref<16x128xf32, #tpu.memory_space<vmem>>) attributes {dimension_semantics = [#tpu.dimension_semantics<parallel>], iteration_bounds = array<i64: 1>, scalar_prefetch = 0 : i64, scratch_operands = 0 : i64, tpu.core_type = #tpu.core_type<tc>, window_params = [{transform_indices = @transform_0, window_bounds = array<i64: 16, 32>}, {transform_indices = @transform_1, window_bounds = array<i64: 16, 16>}, {pipeline_mode = #tpu.pipeline_mode<synchronous>, transform_indices = @transform_2, window_bounds = array<i64: 6, 128, 128>}, {pipeline_mode = #tpu.pipeline_mode<synchronous>, transform_indices = @transform_3, window_bounds = array<i64: 6, 1, 128>}, {transform_indices = @transform_4, window_bounds = array<i64: 16, 128>}]} {
    %c0 = arith.constant 0 : index
    %c0_0 = arith.constant 0 : index
    %0 = vector.load %arg1[%c0, %c0_0] : memref<16x32xf32, #tpu.memory_space<vmem>>, vector<16x32xf32>
    %c0_1 = arith.constant 0 : index
    %c0_2 = arith.constant 0 : index
    %1 = vector.load %arg2[%c0_1, %c0_2] : memref<16x16xf32, #tpu.memory_space<vmem>>, vector<16x16xf32>
    %2 = arith.truncf %0 : vector<16x32xf32> to vector<16x32xbf16>
    %cst = arith.constant 0.000000e+00 : bf16
    %3 = vector.broadcast %cst : bf16 to vector<16x96xbf16>
    %4 = tpu.concatenate %2, %3 in 1 : vector<16x32xbf16>, vector<16x96xbf16> -> vector<16x128xbf16>
    %c0_3 = arith.constant 0 : index
    %c0_4 = arith.constant 0 : index
    %c0_5 = arith.constant 0 : index
    %5 = vector.load %arg3[%c0_3, %c0_4, %c0_5] : memref<6x128x128xbf16, #tpu.memory_space<vmem>>, vector<1x128x128xbf16>
    %6 = vector.shape_cast %5 : vector<1x128x128xbf16> to vector<128x128xbf16>
    %c0_6 = arith.constant 0 : index
    %c0_7 = arith.constant 0 : index
    %c0_8 = arith.constant 0 : index
    %7 = vector.load %arg4[%c0_6, %c0_7, %c0_8] : memref<6x1x128xf32, #tpu.memory_space<vmem>>, vector<1x1x128xf32>
    %8 = vector.shape_cast %7 : vector<1x1x128xf32> to vector<1x128xf32>
    %cst_9 = arith.constant dense<0.000000e+00> : vector<16x128xf32>
    %9 = tpu.matmul %4, %6, %cst_9 {dimension_numbers = #tpu.dot_dimension_numbers<[1], [0], [0], [1], [0, 0, 1, 1], [], []>} : vector<16x128xbf16>, vector<128x128xbf16>, vector<16x128xf32> -> vector<16x128xf32>
    %10 = vector.broadcast %8 : vector<1x128xf32> to vector<16x128xf32>
    %11 = arith.addf %9, %10 : vector<16x128xf32>
    %cst_10 = arith.constant 0.000000e+00 : f32
    %12 = vector.broadcast %cst_10 : f32 to vector<16x128xf32>
    %13 = arith.maximumf %11, %12 : vector<16x128xf32>
    %14 = arith.truncf %13 : vector<16x128xf32> to vector<16x128xbf16>
    %c1 = arith.constant 1 : index
    %c0_11 = arith.constant 0 : index
    %c0_12 = arith.constant 0 : index
    %15 = vector.load %arg3[%c1, %c0_11, %c0_12] : memref<6x128x128xbf16, #tpu.memory_space<vmem>>, vector<1x128x128xbf16>
    %16 = vector.shape_cast %15 : vector<1x128x128xbf16> to vector<128x128xbf16>
    %c1_13 = arith.constant 1 : index
    %c0_14 = arith.constant 0 : index
    %c0_15 = arith.constant 0 : index
    %17 = vector.load %arg4[%c1_13, %c0_14, %c0_15] : memref<6x1x128xf32, #tpu.memory_space<vmem>>, vector<1x1x128xf32>
    %18 = vector.shape_cast %17 : vector<1x1x128xf32> to vector<1x128xf32>
    %cst_16 = arith.constant dense<0.000000e+00> : vector<16x128xf32>
    %19 = tpu.matmul %14, %16, %cst_16 {dimension_numbers = #tpu.dot_dimension_numbers<[1], [0], [0], [1], [0, 0, 1, 1], [], []>} : vector<16x128xbf16>, vector<128x128xbf16>, vector<16x128xf32> -> vector<16x128xf32>
    %20 = vector.broadcast %18 : vector<1x128xf32> to vector<16x128xf32>
    %21 = arith.addf %19, %20 : vector<16x128xf32>
    %cst_17 = arith.constant 0.000000e+00 : f32
    %22 = vector.broadcast %cst_17 : f32 to vector<16x128xf32>
    %23 = arith.maximumf %21, %22 : vector<16x128xf32>
    %24 = arith.truncf %23 : vector<16x128xf32> to vector<16x128xbf16>
    %c2 = arith.constant 2 : index
    %c0_18 = arith.constant 0 : index
    %c0_19 = arith.constant 0 : index
    %25 = vector.load %arg3[%c2, %c0_18, %c0_19] : memref<6x128x128xbf16, #tpu.memory_space<vmem>>, vector<1x128x128xbf16>
    %26 = vector.shape_cast %25 : vector<1x128x128xbf16> to vector<128x128xbf16>
    %c2_20 = arith.constant 2 : index
    %c0_21 = arith.constant 0 : index
    %c0_22 = arith.constant 0 : index
    %27 = vector.load %arg4[%c2_20, %c0_21, %c0_22] : memref<6x1x128xf32, #tpu.memory_space<vmem>>, vector<1x1x128xf32>
    %28 = vector.shape_cast %27 : vector<1x1x128xf32> to vector<1x128xf32>
    %cst_23 = arith.constant dense<0.000000e+00> : vector<16x128xf32>
    %29 = tpu.matmul %24, %26, %cst_23 {dimension_numbers = #tpu.dot_dimension_numbers<[1], [0], [0], [1], [0, 0, 1, 1], [], []>} : vector<16x128xbf16>, vector<128x128xbf16>, vector<16x128xf32> -> vector<16x128xf32>
    %30 = vector.broadcast %28 : vector<1x128xf32> to vector<16x128xf32>
    %31 = arith.addf %29, %30 : vector<16x128xf32>
    %32 = vector.extract_strided_slice %31 {offsets = [0, 0], sizes = [16, 16], strides = [1, 1]} : vector<16x128xf32> to vector<16x16xf32>
    %33 = vector.extract_strided_slice %31 {offsets = [0, 16], sizes = [16, 16], strides = [1, 1]} : vector<16x128xf32> to vector<16x16xf32>
    %cst_24 = arith.constant 5.000000e-01 : f32
    %34 = vector.broadcast %cst_24 : f32 to vector<16x16xf32>
    %35 = arith.mulf %34, %33 : vector<16x16xf32>
    %36 = math.exp %35 : vector<16x16xf32>
    %37 = arith.mulf %36, %1 : vector<16x16xf32>
    %38 = arith.addf %32, %37 : vector<16x16xf32>
    %39 = arith.truncf %38 : vector<16x16xf32> to vector<16x16xbf16>
    %cst_25 = arith.constant 0.000000e+00 : bf16
    %40 = vector.broadcast %cst_25 : bf16 to vector<16x112xbf16>
    %41 = tpu.concatenate %39, %40 in 1 : vector<16x16xbf16>, vector<16x112xbf16> -> vector<16x128xbf16>
    %c3 = arith.constant 3 : index
    %c0_26 = arith.constant 0 : index
    %c0_27 = arith.constant 0 : index
    %42 = vector.load %arg3[%c3, %c0_26, %c0_27] : memref<6x128x128xbf16, #tpu.memory_space<vmem>>, vector<1x128x128xbf16>
    %43 = vector.shape_cast %42 : vector<1x128x128xbf16> to vector<128x128xbf16>
    %c3_28 = arith.constant 3 : index
    %c0_29 = arith.constant 0 : index
    %c0_30 = arith.constant 0 : index
    %44 = vector.load %arg4[%c3_28, %c0_29, %c0_30] : memref<6x1x128xf32, #tpu.memory_space<vmem>>, vector<1x1x128xf32>
    %45 = vector.shape_cast %44 : vector<1x1x128xf32> to vector<1x128xf32>
    %cst_31 = arith.constant dense<0.000000e+00> : vector<16x128xf32>
    %46 = tpu.matmul %41, %43, %cst_31 {dimension_numbers = #tpu.dot_dimension_numbers<[1], [0], [0], [1], [0, 0, 1, 1], [], []>} : vector<16x128xbf16>, vector<128x128xbf16>, vector<16x128xf32> -> vector<16x128xf32>
    %47 = vector.broadcast %45 : vector<1x128xf32> to vector<16x128xf32>
    %48 = arith.addf %46, %47 : vector<16x128xf32>
    %cst_32 = arith.constant 0.000000e+00 : f32
    %49 = vector.broadcast %cst_32 : f32 to vector<16x128xf32>
    %50 = arith.maximumf %48, %49 : vector<16x128xf32>
    %51 = arith.truncf %50 : vector<16x128xf32> to vector<16x128xbf16>
    %c4 = arith.constant 4 : index
    %c0_33 = arith.constant 0 : index
    %c0_34 = arith.constant 0 : index
    %52 = vector.load %arg3[%c4, %c0_33, %c0_34] : memref<6x128x128xbf16, #tpu.memory_space<vmem>>, vector<1x128x128xbf16>
    %53 = vector.shape_cast %52 : vector<1x128x128xbf16> to vector<128x128xbf16>
    %c4_35 = arith.constant 4 : index
    %c0_36 = arith.constant 0 : index
    %c0_37 = arith.constant 0 : index
    %54 = vector.load %arg4[%c4_35, %c0_36, %c0_37] : memref<6x1x128xf32, #tpu.memory_space<vmem>>, vector<1x1x128xf32>
    %55 = vector.shape_cast %54 : vector<1x1x128xf32> to vector<1x128xf32>
    %cst_38 = arith.constant dense<0.000000e+00> : vector<16x128xf32>
    %56 = tpu.matmul %51, %53, %cst_38 {dimension_numbers = #tpu.dot_dimension_numbers<[1], [0], [0], [1], [0, 0, 1, 1], [], []>} : vector<16x128xbf16>, vector<128x128xbf16>, vector<16x128xf32> -> vector<16x128xf32>
    %57 = vector.broadcast %55 : vector<1x128xf32> to vector<16x128xf32>
    %58 = arith.addf %56, %57 : vector<16x128xf32>
    %cst_39 = arith.constant 0.000000e+00 : f32
    %59 = vector.broadcast %cst_39 : f32 to vector<16x128xf32>
    %60 = arith.maximumf %58, %59 : vector<16x128xf32>
    %61 = arith.truncf %60 : vector<16x128xf32> to vector<16x128xbf16>
    %c5 = arith.constant 5 : index
    %c0_40 = arith.constant 0 : index
    %c0_41 = arith.constant 0 : index
    %62 = vector.load %arg3[%c5, %c0_40, %c0_41] : memref<6x128x128xbf16, #tpu.memory_space<vmem>>, vector<1x128x128xbf16>
    %63 = vector.shape_cast %62 : vector<1x128x128xbf16> to vector<128x128xbf16>
    %c5_42 = arith.constant 5 : index
    %c0_43 = arith.constant 0 : index
    %c0_44 = arith.constant 0 : index
    %64 = vector.load %arg4[%c5_42, %c0_43, %c0_44] : memref<6x1x128xf32, #tpu.memory_space<vmem>>, vector<1x1x128xf32>
    %65 = vector.shape_cast %64 : vector<1x1x128xf32> to vector<1x128xf32>
    %cst_45 = arith.constant dense<0.000000e+00> : vector<16x128xf32>
    %66 = tpu.matmul %61, %63, %cst_45 {dimension_numbers = #tpu.dot_dimension_numbers<[1], [0], [0], [1], [0, 0, 1, 1], [], []>} : vector<16x128xbf16>, vector<128x128xbf16>, vector<16x128xf32> -> vector<16x128xf32>
    %67 = vector.broadcast %65 : vector<1x128xf32> to vector<16x128xf32>
    %68 = arith.addf %66, %67 : vector<16x128xf32>
    %69 = vector.extract_strided_slice %68 {offsets = [0, 0], sizes = [16, 32], strides = [1, 1]} : vector<16x128xf32> to vector<16x32xf32>
    %70 = arith.negf %69 : vector<16x32xf32>
    %71 = math.exp %70 : vector<16x32xf32>
    %cst_46 = arith.constant 1.000000e+00 : f32
    %72 = vector.broadcast %cst_46 : f32 to vector<16x32xf32>
    %73 = arith.addf %72, %71 : vector<16x32xf32>
    %74 = arith.divf %72, %73 : vector<16x32xf32>
    %cst_47 = arith.constant 0.000000e+00 : f32
    %75 = vector.broadcast %cst_47 : f32 to vector<16x48xf32>
    %76 = tpu.concatenate %74, %38, %32, %33, %75 in 1 : vector<16x32xf32>, vector<16x16xf32>, vector<16x16xf32>, vector<16x16xf32>, vector<16x48xf32> -> vector<16x128xf32>
    %c0_48 = arith.constant 0 : index
    %c0_49 = arith.constant 0 : index
    %77 = vector.load %arg5[%c0_48, %c0_49] : memref<16x128xf32, #tpu.memory_space<vmem>>, vector<16x128xf32>
    tpu.vector_store %arg5[%c0_48, %c0_49], %76 {strides = array<i32>} : memref<16x128xf32, #tpu.memory_space<vmem>>, vector<16x128xf32>,
    return
  }
  func.func @transform_0(%arg0: i32) -> (i32, i32) {
    %c0_i32 = arith.constant 0 : i32
    %c0_i32_0 = arith.constant 0 : i32
    return %arg0, %c0_i32 : i32, i32
  }
  func.func @transform_1(%arg0: i32) -> (i32, i32) {
    %c0_i32 = arith.constant 0 : i32
    %c0_i32_0 = arith.constant 0 : i32
    return %arg0, %c0_i32 : i32, i32
  }
  func.func @transform_2(%arg0: i32) -> (i32, i32, i32) {
    %c0_i32 = arith.constant 0 : i32
    %c0_i32_0 = arith.constant 0 : i32
    %c0_i32_1 = arith.constant 0 : i32
    %c0_i32_2 = arith.constant 0 : i32
    return %c0_i32, %c0_i32_0, %c0_i32_1 : i32, i32, i32
  }
  func.func @transform_3(%arg0: i32) -> (i32, i32, i32) {
    %c0_i32 = arith.constant 0 : i32
    %c0_i32_0 = arith.constant 0 : i32
    %c0_i32_1 = arith.constant 0 : i32
    %c0_i32_2 = arith.constant 0 : i32
    return %c0_i32, %c0_i32_0, %c0_i32_1 : i32, i32, i32
  }
  func.func @transform_4(%arg0: i32) -> (i32, i32) {
    %c0_i32 = arith.constant 0 : i32
    %c0_i32_0 = arith.constant 0 : i32
    return %arg0, %c0_i32 : i32, i32
  }
}

</mosaic_0001>

<llo_original>
// kernel: vae_forward.1
$region0: #{vae_forward.1}
  #allocation0 [shape = 'u32[]', space=smem, size = 0x4, offset = 0x4, fixed_abs, tag = 'smem constant byte address 0x4 - core index']
  #allocation1 [shape = 'u32[72,128]{1,0:T(1,128)}', space=vmem, size = 0x9000, scoped, tag = 'internal scratch']
  %s0 = inlined_call_operand.vmem [shape: f32[16,32], index: 0, kind: input, shape index: {}]
  %s1 = inlined_call_operand.vmem [shape: f32[16,16], index: 1, kind: input, shape index: {}]
  %s2 = inlined_call_operand.hbm [shape: bf16[6,128,128], index: 2, kind: input, shape index: {}]
  %s3 = inlined_call_operand.vmem [shape: f32[6,1,128], index: 3, kind: input, shape index: {}]
  %s4 = inlined_call_operand.vmem [shape: f32[16,128], index: 4, kind: output, shape index: {}]
  %s5 = sld [smem:[#allocation0]]
  $region30: #{vae_forward.1} parent=0
    _
  %s7 = ssub.s32 1, %s5
  %s8 = scalar_select 0, %s7, %s5
  $region1: #{vae_forward.1} parent=0
    #allocation2 [shape = 'u8[196608]{0}', space=vmem, size = 0x30000, scoped, tag = 'input window, operand 2, single buffered']
    #allocation3 [shape = 's32[1]{0}', space=sflag, size = 0x4, scoped, tag = 'scoped memory for vae_forward.1']
    %9 = vsyncpa [#allocation3], 0
    // Predicated region
    $region2: #{vae_forward.1} parent=1 // pred_check
      _
    $region3: #{vae_forward.1} parent=1 // pred_check_branch
      %11 = sbr.rel (0) target = $region5
    $region4: #{vae_forward.1} parent=1 // pred_region
      _
    $region5: #{vae_forward.1} parent=1 // pred_fallthru
      _
    // Predicated region
    $region6: #{vae_forward.1} parent=1 // pred_check
      _
    $region7: #{vae_forward.1} parent=1 // pred_check_branch
      %13 = sbr.rel (0) target = $region9
    $region8: #{vae_forward.1} parent=1 // pred_region
      _
    $region9: #{vae_forward.1} parent=1 // pred_fallthru
      _
    // Predicated region
    $region10: #{vae_forward.1} parent=1 // pred_check
      _
    $region11: #{vae_forward.1} parent=1 // pred_check_branch
      %15 = sbr.rel (0) target = $region13
    $region12: #{vae_forward.1} parent=1 // pred_region
      %17 = vsyncadd [#allocation3], 0
      %s18 = sshll.u32 %s2, 4
      %s19 = int_to_ptr.hbm [resolvable:$true] %s18
      %s20 = sshll.u32 [#allocation2], 4
      %s21 = int_to_ptr.vmem [resolvable:$true] %s20
      %26 = dma.hbm_to_vmem [thread:$0]  %s19, 6144, %s21, [#allocation3], 64, 64, 4
    $region13: #{vae_forward.1} parent=1 // pred_fallthru
      _
    // Predicated region
    $region14: #{vae_forward.1} parent=1 // pred_check
      _
    $region15: #{vae_forward.1} parent=1 // pred_check_branch
      %28 = sbr.rel (0) target = $region17
    $region16: #{vae_forward.1} parent=1 // pred_region
      _
    $region17: #{vae_forward.1} parent=1 // pred_fallthru
      _
    // Predicated region
    $region18: #{vae_forward.1} parent=1 // pred_check
      _
    $region19: #{vae_forward.1} parent=1 // pred_check_branch
      %30 = sbr.rel (0) target = $region21
    $region20: #{vae_forward.1} parent=1 // pred_region
      %32 = dma.done [#allocation3], 6144
    $region21: #{vae_forward.1} parent=1 // pred_fallthru
      _
    %v34 = vld [vmem:[%s0] sm:$0xff]
    %v35 = vld [vmem:[%s0 + $0x8] sm:$0xff]
    %v36 = vld [vmem:[%s1] sm:$0xff]
    %v37 = vld [vmem:[%s1 + $0x8] sm:$0xff]
    %v38 = vpack.c.bf16 %v34, %v34
    %v39 = vpack.c.bf16 %v35, %v35
    %v42 = vunpack.c.l.b16 %v38
    %v43 = vunpack.c.l.b16 %v39
    %v44 = vpack.c.b16 %v43, %v42
    %vm45 = vcmask 261120
    %v48 = vsel %vm45, %v44, 0
    %v50 = vld [vmem:[#allocation2] sm:$0xf]
    %v51 = vld [vmem:[#allocation2 + $0x4] sm:$0xf]
    %v52 = vld [vmem:[#allocation2 + $0x8] sm:$0xf]
    %v53 = vld [vmem:[#allocation2 + $0xc] sm:$0xf]
    %v54 = vld [vmem:[#allocation2 + $0x10] sm:$0xf]
    %v55 = vld [vmem:[#allocation2 + $0x14] sm:$0xf]
    %v56 = vld [vmem:[#allocation2 + $0x18] sm:$0xf]
    %v57 = vld [vmem:[#allocation2 + $0x1c] sm:$0xf]
    %v58 = vld [vmem:[#allocation2 + $0x20] sm:$0xf]
    %v59 = vld [vmem:[#allocation2 + $0x24] sm:$0xf]
    %v60 = vld [vmem:[#allocation2 + $0x28] sm:$0xf]
    %v61 = vld [vmem:[#allocation2 + $0x2c] sm:$0xf]
    %v62 = vld [vmem:[#allocation2 + $0x30] sm:$0xf]
    %v63 = vld [vmem:[#allocation2 + $0x34] sm:$0xf]
    %v64 = vld [vmem:[#allocation2 + $0x38] sm:$0xf]
    %v65 = vld [vmem:[#allocation2 + $0x3c] sm:$0xf]
    %v66 = vld [vmem:[%s3] sm:$0x1]
    %v68 = vperm.slane %v66, 0
    %v86 = vunpack.c.l.b16 %v50
    %v87 = vunpack.c.l.b16 %v51
    %v88 = vunpack.c.l.b16 %v52
    %v89 = vunpack.c.l.b16 %v53
    %v90 = vunpack.c.l.b16 %v54
    %v91 = vunpack.c.l.b16 %v55
    %v92 = vunpack.c.l.b16 %v56
    %v93 = vunpack.c.l.b16 %v57
    %v94 = vunpack.c.l.b16 %v58
    %v95 = vunpack.c.l.b16 %v59
    %v96 = vunpack.c.l.b16 %v60
    %v97 = vunpack.c.l.b16 %v61
    %v98 = vunpack.c.l.b16 %v62
    %v99 = vunpack.c.l.b16 %v63
    %v100 = vunpack.c.l.b16 %v64
    %v101 = vunpack.c.l.b16 %v65
    %v102 = vpack.c.b16 %v87, %v86
    %v103 = vpack.c.b16 %v89, %v88
    %v104 = vpack.c.b16 %v91, %v90
    %v105 = vpack.c.b16 %v93, %v92
    %v106 = vpack.c.b16 %v95, %v94
    %v107 = vpack.c.b16 %v97, %v96
    %v108 = vpack.c.b16 %v99, %v98
    %v109 = vpack.c.b16 %v101, %v100
    %118 = vmatpush.bf16.msra.mxu0 %v109
    %119 = vmatpush.bf16.msra.mxu0 %v108
    %120 = vmatpush.bf16.msra.mxu0 %v107
    %121 = vmatpush.bf16.msra.mxu0 %v106
    %122 = vmatpush.bf16.msra.mxu0 %v105
    %123 = vmatpush.bf16.msra.mxu0 %v104
    %124 = vmatpush.bf16.msra.mxu0 %v103
    %125 = vmatpush.bf16.msra.mxu0 %v102
    %126 = vmatmul.bf16.gmra.mxu0 %v48
    %v127 = vpop.f32.mrf.mxu0
    %v128 = vadd.f32 %v68, %v127
    %v129 = vpop.f32.mrf.mxu0
    %v130 = vadd.f32 %v68, %v129
    %131 = vdwg.mxu0
    %v132 = vmax.f32 %v128, 0.0
    %v133 = vmax.f32 %v130, 0.0
    %v134 = vpack.c.bf16 %v133, %v132
    %s135 = scalar_lea.vmem [#allocation2], 64
    %v136 = vld [vmem:[%s135] sm:$0xf]
    %v137 = vld [vmem:[%s135 + $0x4] sm:$0xf]
    %v138 = vld [vmem:[%s135 + $0x8] sm:$0xf]
    %v139 = vld [vmem:[%s135 + $0xc] sm:$0xf]
    %v140 = vld [vmem:[%s135 + $0x10] sm:$0xf]
    %v141 = vld [vmem:[%s135 + $0x14] sm:$0xf]
    %v142 = vld [vmem:[%s135 + $0x18] sm:$0xf]
    %v143 = vld [vmem:[%s135 + $0x1c] sm:$0xf]
    %v144 = vld [vmem:[%s135 + $0x20] sm:$0xf]
    %v145 = vld [vmem:[%s135 + $0x24] sm:$0xf]
    %v146 = vld [vmem:[%s135 + $0x28] sm:$0xf]
    %v147 = vld [vmem:[%s135 + $0x2c] sm:$0xf]
    %v148 = vld [vmem:[%s135 + $0x30] sm:$0xf]
    %v149 = vld [vmem:[%s135 + $0x34] sm:$0xf]
    %v150 = vld [vmem:[%s135 + $0x38] sm:$0xf]
    %v151 = vld [vmem:[%s135 + $0x3c] sm:$0xf]
    %s152 = scalar_lea.vmem %s3, 1
    %v153 = vld [vmem:[%s152] sm:$0x1]
    %v155 = vperm.slane %v153, 0
    %v173 = vunpack.c.l.b16 %v136
    %v174 = vunpack.c.l.b16 %v137
    %v175 = vunpack.c.l.b16 %v138
    %v176 = vunpack.c.l.b16 %v139
    %v177 = vunpack.c.l.b16 %v140
    %v178 = vunpack.c.l.b16 %v141
    %v179 = vunpack.c.l.b16 %v142
    %v180 = vunpack.c.l.b16 %v143
    %v181 = vunpack.c.l.b16 %v144
    %v182 = vunpack.c.l.b16 %v145
    %v183 = vunpack.c.l.b16 %v146
    %v184 = vunpack.c.l.b16 %v147
    %v185 = vunpack.c.l.b16 %v148
    %v186 = vunpack.c.l.b16 %v149
    %v187 = vunpack.c.l.b16 %v150
    %v188 = vunpack.c.l.b16 %v151
    %v189 = vpack.c.b16 %v174, %v173
    %v190 = vpack.c.b16 %v176, %v175
    %v191 = vpack.c.b16 %v178, %v177
    %v192 = vpack.c.b16 %v180, %v179
    %v193 = vpack.c.b16 %v182, %v181
    %v194 = vpack.c.b16 %v184, %v183
    %v195 = vpack.c.b16 %v186, %v185
    %v196 = vpack.c.b16 %v188, %v187
    %205 = vmatpush.bf16.msra.mxu0 %v196
    %206 = vmatpush.bf16.msra.mxu0 %v195
    %207 = vmatpush.bf16.msra.mxu0 %v194
    %208 = vmatpush.bf16.msra.mxu0 %v193
    %209 = vmatpush.bf16.msra.mxu0 %v192
    %210 = vmatpush.bf16.msra.mxu0 %v191
    %211 = vmatpush.bf16.msra.mxu0 %v190
    %212 = vmatpush.bf16.msra.mxu0 %v189
    %213 = vmatmul.bf16.gmra.mxu0 %v134
    %v214 = vpop.f32.mrf.mxu0
    %v215 = vadd.f32 %v155, %v214
    %v216 = vpop.f32.mrf.mxu0
    %v217 = vadd.f32 %v155, %v216
    %218 = vdwg.mxu0
    %v219 = vmax.f32 %v215, 0.0
    %v220 = vmax.f32 %v217, 0.0
    %v221 = vpack.c.bf16 %v220, %v219
    %s222 = scalar_lea.vmem [#allocation2], 128
    %v223 = vld [vmem:[%s222] sm:$0xf]
    %v224 = vld [vmem:[%s222 + $0x4] sm:$0xf]
    %v225 = vld [vmem:[%s222 + $0x8] sm:$0xf]
    %v226 = vld [vmem:[%s222 + $0xc] sm:$0xf]
    %v227 = vld [vmem:[%s222 + $0x10] sm:$0xf]
    %v228 = vld [vmem:[%s222 + $0x14] sm:$0xf]
    %v229 = vld [vmem:[%s222 + $0x18] sm:$0xf]
    %v230 = vld [vmem:[%s222 + $0x1c] sm:$0xf]
    %v231 = vld [vmem:[%s222 + $0x20] sm:$0xf]
    %v232 = vld [vmem:[%s222 + $0x24] sm:$0xf]
    %v233 = vld [vmem:[%s222 + $0x28] sm:$0xf]
    %v234 = vld [vmem:[%s222 + $0x2c] sm:$0xf]
    %v235 = vld [vmem:[%s222 + $0x30] sm:$0xf]
    %v236 = vld [vmem:[%s222 + $0x34] sm:$0xf]
    %v237 = vld [vmem:[%s222 + $0x38] sm:$0xf]
    %v238 = vld [vmem:[%s222 + $0x3c] sm:$0xf]
    %s239 = scalar_lea.vmem %s3, 2
    %v240 = vld [vmem:[%s239] sm:$0x1]
    %v242 = vperm.slane %v240, 0
    %v260 = vunpack.c.l.b16 %v223
    %v261 = vunpack.c.l.b16 %v224
    %v262 = vunpack.c.l.b16 %v225
    %v263 = vunpack.c.l.b16 %v226
    %v264 = vunpack.c.l.b16 %v227
    %v265 = vunpack.c.l.b16 %v228
    %v266 = vunpack.c.l.b16 %v229
    %v267 = vunpack.c.l.b16 %v230
    %v268 = vunpack.c.l.b16 %v231
    %v269 = vunpack.c.l.b16 %v232
    %v270 = vunpack.c.l.b16 %v233
    %v271 = vunpack.c.l.b16 %v234
    %v272 = vunpack.c.l.b16 %v235
    %v273 = vunpack.c.l.b16 %v236
    %v274 = vunpack.c.l.b16 %v237
    %v275 = vunpack.c.l.b16 %v238
    %v276 = vpack.c.b16 %v261, %v260
    %v277 = vpack.c.b16 %v263, %v262
    %v278 = vpack.c.b16 %v265, %v264
    %v279 = vpack.c.b16 %v267, %v266
    %v280 = vpack.c.b16 %v269, %v268
    %v281 = vpack.c.b16 %v271, %v270
    %v282 = vpack.c.b16 %v273, %v272
    %v283 = vpack.c.b16 %v275, %v274
    %292 = vmatpush.bf16.msra.mxu0 %v283
    %293 = vmatpush.bf16.msra.mxu0 %v282
    %294 = vmatpush.bf16.msra.mxu0 %v281
    %295 = vmatpush.bf16.msra.mxu0 %v280
    %296 = vmatpush.bf16.msra.mxu0 %v279
    %297 = vmatpush.bf16.msra.mxu0 %v278
    %298 = vmatpush.bf16.msra.mxu0 %v277
    %299 = vmatpush.bf16.msra.mxu0 %v276
    %300 = vmatmul.bf16.gmra.mxu0 %v221
    %v301 = vpop.f32.mrf.mxu0
    %v302 = vadd.f32 %v242, %v301
    %v303 = vpop.f32.mrf.mxu0
    %v304 = vadd.f32 %v242, %v303
    %305 = vdwg.mxu0
    %v306 = vmul.f32 %v302, 0.5
    %v307 = vmul.f32 %v304, 0.5
    %v308 = vmul.f32 %v306, 1.442695
    %v309 = vpow.pop %v308
    %v310 = vmul.f32 %v307, 1.442695
    %v311 = vpow.pop %v310
    %314 = vrot.lane.b32.xlu0 %v36, 16
    %v315 = vpop.permute.xlu0 %314
    %316 = vrot.lane.b32.xlu0 %v37, 16
    %v317 = vpop.permute.xlu0 %316
    %v320 = vmul.f32 %v309, %v315
    %v321 = vmul.f32 %v311, %v317
    %324 = vrot.lane.b32.xlu0 %v320, 112
    %v325 = vpop.permute.xlu0 %324
    %326 = vrot.lane.b32.xlu0 %v321, 112
    %v327 = vpop.permute.xlu0 %326
    %v330 = vadd.f32 %v302, %v325
    %v331 = vadd.f32 %v304, %v327
    %v332 = vpack.c.bf16 %v330, %v330
    %v333 = vpack.c.bf16 %v331, %v331
    %v336 = vunpack.c.l.b16 %v332
    %v337 = vunpack.c.l.b16 %v333
    %v338 = vpack.c.b16 %v337, %v336
    %vm339 = vcmask 130048
    %v341 = vsel %vm339, %v338, 0
    %s343 = scalar_lea.vmem [#allocation2], 192
    %v344 = vld [vmem:[%s343] sm:$0xf]
    %v345 = vld [vmem:[%s343 + $0x4] sm:$0xf]
    %v346 = vld [vmem:[%s343 + $0x8] sm:$0xf]
    %v347 = vld [vmem:[%s343 + $0xc] sm:$0xf]
    %v348 = vld [vmem:[%s343 + $0x10] sm:$0xf]
    %v349 = vld [vmem:[%s343 + $0x14] sm:$0xf]
    %v350 = vld [vmem:[%s343 + $0x18] sm:$0xf]
    %v351 = vld [vmem:[%s343 + $0x1c] sm:$0xf]
    %v352 = vld [vmem:[%s343 + $0x20] sm:$0xf]
    %v353 = vld [vmem:[%s343 + $0x24] sm:$0xf]
    %v354 = vld [vmem:[%s343 + $0x28] sm:$0xf]
    %v355 = vld [vmem:[%s343 + $0x2c] sm:$0xf]
    %v356 = vld [vmem:[%s343 + $0x30] sm:$0xf]
    %v357 = vld [vmem:[%s343 + $0x34] sm:$0xf]
    %v358 = vld [vmem:[%s343 + $0x38] sm:$0xf]
    %v359 = vld [vmem:[%s343 + $0x3c] sm:$0xf]
    %s360 = scalar_lea.vmem %s3, 3
    %v361 = vld [vmem:[%s360] sm:$0x1]
    %v363 = vperm.slane %v361, 0
    %v381 = vunpack.c.l.b16 %v344
    %v382 = vunpack.c.l.b16 %v345
    %v383 = vunpack.c.l.b16 %v346
    %v384 = vunpack.c.l.b16 %v347
    %v385 = vunpack.c.l.b16 %v348
    %v386 = vunpack.c.l.b16 %v349
    %v387 = vunpack.c.l.b16 %v350
    %v388 = vunpack.c.l.b16 %v351
    %v389 = vunpack.c.l.b16 %v352
    %v390 = vunpack.c.l.b16 %v353
    %v391 = vunpack.c.l.b16 %v354
    %v392 = vunpack.c.l.b16 %v355
    %v393 = vunpack.c.l.b16 %v356
    %v394 = vunpack.c.l.b16 %v357
    %v395 = vunpack.c.l.b16 %v358
    %v396 = vunpack.c.l.b16 %v359
    %v397 = vpack.c.b16 %v382, %v381
    %v398 = vpack.c.b16 %v384, %v383
    %v399 = vpack.c.b16 %v386, %v385
    %v400 = vpack.c.b16 %v388, %v387
    %v401 = vpack.c.b16 %v390, %v389
    %v402 = vpack.c.b16 %v392, %v391
    %v403 = vpack.c.b16 %v394, %v393
    %v404 = vpack.c.b16 %v396, %v395
    %413 = vmatpush.bf16.msra.mxu0 %v404
    %414 = vmatpush.bf16.msra.mxu0 %v403
    %415 = vmatpush.bf16.msra.mxu0 %v402
    %416 = vmatpush.bf16.msra.mxu0 %v401
    %417 = vmatpush.bf16.msra.mxu0 %v400
    %418 = vmatpush.bf16.msra.mxu0 %v399
    %419 = vmatpush.bf16.msra.mxu0 %v398
    %420 = vmatpush.bf16.msra.mxu0 %v397
    %421 = vmatmul.bf16.gmra.mxu0 %v341
    %v422 = vpop.f32.mrf.mxu0
    %v423 = vadd.f32 %v363, %v422
    %v424 = vpop.f32.mrf.mxu0
    %v425 = vadd.f32 %v363, %v424
    %426 = vdwg.mxu0
    %v427 = vmax.f32 %v423, 0.0
    %v428 = vmax.f32 %v425, 0.0
    %v429 = vpack.c.bf16 %v428, %v427
    %s430 = scalar_lea.vmem [#allocation2], 256
    %v431 = vld [vmem:[%s430] sm:$0xf]
    %v432 = vld [vmem:[%s430 + $0x4] sm:$0xf]
    %v433 = vld [vmem:[%s430 + $0x8] sm:$0xf]
    %v434 = vld [vmem:[%s430 + $0xc] sm:$0xf]
    %v435 = vld [vmem:[%s430 + $0x10] sm:$0xf]
    %v436 = vld [vmem:[%s430 + $0x14] sm:$0xf]
    %v437 = vld [vmem:[%s430 + $0x18] sm:$0xf]
    %v438 = vld [vmem:[%s430 + $0x1c] sm:$0xf]
    %v439 = vld [vmem:[%s430 + $0x20] sm:$0xf]
    %v440 = vld [vmem:[%s430 + $0x24] sm:$0xf]
    %v441 = vld [vmem:[%s430 + $0x28] sm:$0xf]
    %v442 = vld [vmem:[%s430 + $0x2c] sm:$0xf]
    %v443 = vld [vmem:[%s430 + $0x30] sm:$0xf]
    %v444 = vld [vmem:[%s430 + $0x34] sm:$0xf]
    %v445 = vld [vmem:[%s430 + $0x38] sm:$0xf]
    %v446 = vld [vmem:[%s430 + $0x3c] sm:$0xf]
    %s447 = scalar_lea.vmem %s3, 4
    %v448 = vld [vmem:[%s447] sm:$0x1]
    %v450 = vperm.slane %v448, 0
    %v468 = vunpack.c.l.b16 %v431
    %v469 = vunpack.c.l.b16 %v432
    %v470 = vunpack.c.l.b16 %v433
    %v471 = vunpack.c.l.b16 %v434
    %v472 = vunpack.c.l.b16 %v435
    %v473 = vunpack.c.l.b16 %v436
    %v474 = vunpack.c.l.b16 %v437
    %v475 = vunpack.c.l.b16 %v438
    %v476 = vunpack.c.l.b16 %v439
    %v477 = vunpack.c.l.b16 %v440
    %v478 = vunpack.c.l.b16 %v441
    %v479 = vunpack.c.l.b16 %v442
    %v480 = vunpack.c.l.b16 %v443
    %v481 = vunpack.c.l.b16 %v444
    %v482 = vunpack.c.l.b16 %v445
    %v483 = vunpack.c.l.b16 %v446
    %v484 = vpack.c.b16 %v469, %v468
    %v485 = vpack.c.b16 %v471, %v470
    %v486 = vpack.c.b16 %v473, %v472
    %v487 = vpack.c.b16 %v475, %v474
    %v488 = vpack.c.b16 %v477, %v476
    %v489 = vpack.c.b16 %v479, %v478
    %v490 = vpack.c.b16 %v481, %v480
    %v491 = vpack.c.b16 %v483, %v482
    %500 = vmatpush.bf16.msra.mxu0 %v491
    %501 = vmatpush.bf16.msra.mxu0 %v490
    %502 = vmatpush.bf16.msra.mxu0 %v489
    %503 = vmatpush.bf16.msra.mxu0 %v488
    %504 = vmatpush.bf16.msra.mxu0 %v487
    %505 = vmatpush.bf16.msra.mxu0 %v486
    %506 = vmatpush.bf16.msra.mxu0 %v485
    %507 = vmatpush.bf16.msra.mxu0 %v484
    %508 = vmatmul.bf16.gmra.mxu0 %v429
    %v509 = vpop.f32.mrf.mxu0
    %v510 = vadd.f32 %v450, %v509
    %v511 = vpop.f32.mrf.mxu0
    %v512 = vadd.f32 %v450, %v511
    %513 = vdwg.mxu0
    %v514 = vmax.f32 %v510, 0.0
    %v515 = vmax.f32 %v512, 0.0
    %v516 = vpack.c.bf16 %v515, %v514
    %s517 = scalar_lea.vmem [#allocation2], 320
    %v518 = vld [vmem:[%s517] sm:$0xf]
    %v519 = vld [vmem:[%s517 + $0x4] sm:$0xf]
    %v520 = vld [vmem:[%s517 + $0x8] sm:$0xf]
    %v521 = vld [vmem:[%s517 + $0xc] sm:$0xf]
    %v522 = vld [vmem:[%s517 + $0x10] sm:$0xf]
    %v523 = vld [vmem:[%s517 + $0x14] sm:$0xf]
    %v524 = vld [vmem:[%s517 + $0x18] sm:$0xf]
    %v525 = vld [vmem:[%s517 + $0x1c] sm:$0xf]
    %v526 = vld [vmem:[%s517 + $0x20] sm:$0xf]
    %v527 = vld [vmem:[%s517 + $0x24] sm:$0xf]
    %v528 = vld [vmem:[%s517 + $0x28] sm:$0xf]
    %v529 = vld [vmem:[%s517 + $0x2c] sm:$0xf]
    %v530 = vld [vmem:[%s517 + $0x30] sm:$0xf]
    %v531 = vld [vmem:[%s517 + $0x34] sm:$0xf]
    %v532 = vld [vmem:[%s517 + $0x38] sm:$0xf]
    %v533 = vld [vmem:[%s517 + $0x3c] sm:$0xf]
    %s534 = scalar_lea.vmem %s3, 5
    %v535 = vld [vmem:[%s534] sm:$0x1]
    %v537 = vperm.slane %v535, 0
    %v555 = vunpack.c.l.b16 %v518
    %v556 = vunpack.c.l.b16 %v519
    %v557 = vunpack.c.l.b16 %v520
    %v558 = vunpack.c.l.b16 %v521
    %v559 = vunpack.c.l.b16 %v522
    %v560 = vunpack.c.l.b16 %v523
    %v561 = vunpack.c.l.b16 %v524
    %v562 = vunpack.c.l.b16 %v525
    %v563 = vunpack.c.l.b16 %v526
    %v564 = vunpack.c.l.b16 %v527
    %v565 = vunpack.c.l.b16 %v528
    %v566 = vunpack.c.l.b16 %v529
    %v567 = vunpack.c.l.b16 %v530
    %v568 = vunpack.c.l.b16 %v531
    %v569 = vunpack.c.l.b16 %v532
    %v570 = vunpack.c.l.b16 %v533
    %v571 = vpack.c.b16 %v556, %v555
    %v572 = vpack.c.b16 %v558, %v557
    %v573 = vpack.c.b16 %v560, %v559
    %v574 = vpack.c.b16 %v562, %v561
    %v575 = vpack.c.b16 %v564, %v563
    %v576 = vpack.c.b16 %v566, %v565
    %v577 = vpack.c.b16 %v568, %v567
    %v578 = vpack.c.b16 %v570, %v569
    %587 = vmatpush.bf16.msra.mxu0 %v578
    %588 = vmatpush.bf16.msra.mxu0 %v577
    %589 = vmatpush.bf16.msra.mxu0 %v576
    %590 = vmatpush.bf16.msra.mxu0 %v575
    %591 = vmatpush.bf16.msra.mxu0 %v574
    %592 = vmatpush.bf16.msra.mxu0 %v573
    %593 = vmatpush.bf16.msra.mxu0 %v572
    %594 = vmatpush.bf16.msra.mxu0 %v571
    %595 = vmatmul.bf16.gmra.mxu0 %v516
    %v596 = vpop.f32.mrf.mxu0
    %v597 = vadd.f32 %v537, %v596
    %v598 = vpop.f32.mrf.mxu0
    %v599 = vadd.f32 %v537, %v598
    %600 = vdwg.mxu0
    %v601 = vxor.u32 %v597, 2147483648
    %v602 = vxor.u32 %v599, 2147483648
    %v603 = vmul.f32 %v601, 1.442695
    %v604 = vpow.pop %v603
    %v605 = vmul.f32 %v602, 1.442695
    %v606 = vpow.pop %v605
    %v607 = vadd.f32 %v604, 1.0
    %v608 = vadd.f32 %v606, 1.0
    %v609 = vrcp.pop %v607
    %v610 = vmul.f32 %v607, %v609
    %v611 = vsub.f32 1.0, %v610
    %v612 = vmul.f32 %v609, %v611
    %v613 = vadd.f32 %v609, %v612
    %vm614 = vweird.f32 %v607
    %vm615 = vweird.f32 %v609
    %vm616 = vmor %vm614, %vm615
    %v617 = vsel %vm616, %v609, %v613
    %v618 = vand.u32 2147483647, %v607
    %vm619 = vcmp.eq.f32.partialorder %v618, 8.507059e+37
    %v620 = vand.u32 %v607, 2147483648
    %v621 = vor.u32 1.1754944e-38, %v620
    %v622 = vsel %vm619, %v621, %v617
    %v623 = vmul.f32 1.0, %v622
    %v624 = vrcp.pop %v608
    %v625 = vmul.f32 %v608, %v624
    %v626 = vsub.f32 1.0, %v625
    %v627 = vmul.f32 %v624, %v626
    %v628 = vadd.f32 %v624, %v627
    %vm629 = vweird.f32 %v608
    %vm630 = vweird.f32 %v624
    %vm631 = vmor %vm629, %vm630
    %v632 = vsel %vm631, %v624, %v628
    %v633 = vand.u32 2147483647, %v608
    %vm634 = vcmp.eq.f32.partialorder %v633, 8.507059e+37
    %v635 = vand.u32 %v608, 2147483648
    %v636 = vor.u32 1.1754944e-38, %v635
    %v637 = vsel %vm634, %v636, %v632
    %v638 = vmul.f32 1.0, %v637
    %641 = vrot.lane.b32.xlu0 %v330, 32
    %v642 = vpop.permute.xlu0 %641
    %643 = vrot.lane.b32.xlu0 %v331, 32
    %v644 = vpop.permute.xlu0 %643
    %649 = vrot.lane.b32.xlu0 %v302, 48
    %v650 = vpop.permute.xlu0 %649
    %651 = vrot.lane.b32.xlu0 %v304, 48
    %v652 = vpop.permute.xlu0 %651
    %v655 = vsel %vm45, %v623, %v642
    %v656 = vsel %vm45, %v638, %v644
    %vm657 = vcmask 392192
    %v658 = vsel %vm657, %v655, %v650
    %v659 = vsel %vm657, %v656, %v652
    %vm660 = vcmask 523264
    %v661 = vsel %vm660, %v658, %v650
    %v662 = vsel %vm660, %v659, %v652
    %vm663 = vcmask 654336
    %v664 = vsel %vm663, %v661, 0.0
    %v665 = vsel %vm663, %v662, 0.0
    %666 = vst [vmem:[%s4] sm:$0xff] %v664
    %667 = vst [vmem:[%s4 + $0x8] sm:$0xff] %v665
    // Predicated region
    $region22: #{vae_forward.1} parent=1 // pred_check
      _
    $region23: #{vae_forward.1} parent=1 // pred_check_branch
      %669 = sbr.rel (0) target = $region25
    $region24: #{vae_forward.1} parent=1 // pred_region
      _
    $region25: #{vae_forward.1} parent=1 // pred_fallthru
      _
    // Predicated region
    $region26: #{vae_forward.1} parent=1 // pred_check
      _
    $region27: #{vae_forward.1} parent=1 // pred_check_branch
      %671 = sbr.rel (0) target = $region29
    $region28: #{vae_forward.1} parent=1 // pred_region
      _
    $region29: #{vae_forward.1} parent=1 // pred_fallthru
      _
    %672 = vsyncpa [#allocation3], 1

</llo_original>
